<compile_context>
chip_gen: v6e
topology: v6e:2x2x1
jax: 0.10.0
libtpu: 0.0.40
codegen_flags: <defaults>
</compile_context>

<pallas_src>
import jax
import jax.numpy as jnp
import numpy as np
from jax import lax
from jax.experimental import pallas as pl
from jax.experimental.pallas import tpu as pltpu

HIDDEN_SIZES = (64, 64)

# Contract dim 1 of lhs with dim 1 of rhs (i.e. lhs @ rhs.T), no batch dims.
_TRANS_B_DIMS = (((1,), (1,)), ((), ()))


def _critic_kernel(x_ref, w1t_ref, b1t_ref, w2t_ref, b2t_ref, w3r_ref, b3_ref, o_ref):
    """Lane-dense fused MLP: every intermediate carries the batch on the lane axis."""
    cdt = w2t_ref.dtype            # compute dtype for activations / tanh (f32 or bf16)

    x = x_ref[...]                 # [block_b, D] in the streaming dtype (bf16 or f32)

    # Layer 1: W1t [H1, D] contracted with x [block_b, D] on the feature axis
    # -> z1t [H1, block_b], batch on lanes.  MXU accumulation in f32.
    z1t = lax.dot_general(w1t_ref[...], x, _TRANS_B_DIMS,
                          preferred_element_type=jnp.float32)
    h1t = jnp.tanh((z1t + b1t_ref[...]).astype(cdt))            # [H1, block_b]

    # Layer 2: W2t [H2, H1] @ h1t [H1, block_b] -> [H2, block_b]
    z2t = jnp.dot(w2t_ref[...], h1t, preferred_element_type=jnp.float32)
    h2t = jnp.tanh((z2t + b2t_ref[...]).astype(cdt))            # [H2, block_b]

    # Final layer: w3_row [1, H2] @ h2t [H2, block_b] -> [1, block_b] lane-dense slab,
    # stored as a single full-width unmasked vst per grid step.
    out = jnp.dot(w3r_ref[...], h2t, preferred_element_type=jnp.float32)
    o_ref[...] = (out + b3_ref[...]).astype(o_ref.dtype)


def _round_up(x, m):
    return ((x + m - 1) // m) * m


def _default_compute_dtype():
    """bf16 activations/tanh on chips with a bf16 VPU/EUP (v6e, v7x); f32 otherwise."""
    try:
        kind = jax.devices()[0].device_kind.lower()
    except Exception:
        return jnp.float32
    if any(t in kind for t in ("v2", "v3", "v4", "v5")):
        return jnp.float32        # no bf16 VPU/EUP -> bf16 tanh would only add casts
    return jnp.bfloat16


def _default_vmem_limit_bytes():
    """Scoped-VMEM limit with double-buffer headroom, per generation (64 vs 128 MiB)."""
    cap = 64 * 1024 * 1024
    try:
        cap = pltpu.get_tpu_info().vmem_capacity_bytes
    except Exception:
        pass
    return int(min(cap * 3 // 4, 96 * 1024 * 1024))


def _default_block_b(B, cap=8192):
    """Lane-dense batch tile: multiple of 128, even number (>=2) of steps for large B."""
    if B <= 256:
        return _round_up(B, 8)                    # tiny batch: one small tile
    nb = max(2, -(-B // cap))                     # >= 2 steps so both v7x TCs get work
    nb += nb % 2                                  # even step count -> balanced TC split
    return _round_up(-(-B // nb), 128)


def critic_net_forward(state, params, *, block_b=None,
                       compute_dtype=None, input_dtype=jnp.bfloat16):
    """Full CriticNet forward pass (state -> scalar value) as one fused Pallas kernel.

    state        : [B, state_dim]
    params       : dict with w1 [D,H1], b1 [1,H1], w2 [H1,H2], b2 [1,H2], w3 [H2,1], b3 [1,1]
                   (layout y = x @ W + b, i.e. already transposed vs. torch Linear.weight)
    block_b      : batch tile.  Rounded to a multiple of 8; use multiples of 128 to keep
                   every intermediate/store lane-dense.  Default picks a 128-multiple with
                   an even number of grid steps, capped for VMEM.
    compute_dtype: dtype for activations / tanh.  Default: bf16 on v6e/v7x, f32 on v5e and
                   older.  Matmul accumulation, biases and the output always stay f32.
    input_dtype  : streaming dtype for the state tile (dominant HBM traffic).  Default
                   bf16; pass jnp.float32 for parity with the f32 reference.
    Returns [B, 1] float32 values.
    """
    B, D = state.shape
    H1 = params["w1"].shape[1]
    H2 = params["w2"].shape[1]

    if compute_dtype is None:
        compute_dtype = _default_compute_dtype()
    if block_b is None:
        block_b = _default_block_b(B)
    else:
        block_b = _round_up(int(block_b), 8)      # keep the (8,128) BlockSpec rule

    nb = pl.cdiv(B, block_b)

    # Weights pre-transposed so the whole hidden path keeps the batch on lanes.
    w1t = params["w1"].T.astype(input_dtype)      # [H1, D]  (matches x's streaming dtype)
    w2t = params["w2"].T.astype(compute_dtype)    # [H2, H1]
    w3r = params["w3"].T.astype(compute_dtype)    # [1, H2]
    b1t = params["b1"].reshape(H1, 1).astype(jnp.float32)
    b2t = params["b2"].reshape(H2, 1).astype(jnp.float32)
    b3 = params["b3"].reshape(1, 1).astype(jnp.float32)

    x = state.astype(input_dtype)                 # bf16 stream halves the input DMA

    full = lambda i: (0, 0)                       # weights/biases stay VMEM-resident

    out = pl.pallas_call(
        _critic_kernel,
        out_shape=jax.ShapeDtypeStruct((nb, 1, block_b), jnp.float32),
        grid_spec=pltpu.PrefetchScalarGridSpec(
            num_scalar_prefetch=0,
            grid=(nb,),
            in_specs=[
                pl.BlockSpec((block_b, D), lambda i: (i, 0)),   # state tile (pipelined)
                pl.BlockSpec((H1, D), full),
                pl.BlockSpec((H1, 1), full),
                pl.BlockSpec((H2, H1), full),
                pl.BlockSpec((H2, 1), full),
                pl.BlockSpec((1, H2), full),
                pl.BlockSpec((1, 1), full),
            ],
            # Lane-dense output: one [1, block_b] slab per grid step (batch on lanes).
            out_specs=pl.BlockSpec((None, 1, block_b), lambda i: (i, 0, 0)),
        ),
        compiler_params=pltpu.CompilerParams(
            dimension_semantics=("parallel",),    # batch tiles shard across TCs (v7x)
            vmem_limit_bytes=_default_vmem_limit_bytes(),
        ),
    )(x, w1t, b1t, w2t, b2t, w3r, b3)

    # (nb, 1, block_b) -> (nb*block_b, 1).  A partial final tile only produces
    # row-independent garbage lanes, discarded here (no whole-array jnp.pad needed).
    return out.reshape(nb * block_b, 1)[:B]


def init_params(key, state_dim, hidden_sizes=HIDDEN_SIZES):
    """nn.Linear-style init U(-1/sqrt(fan_in), 1/sqrt(fan_in)); W stored as [in, out]."""
    params = {}
    dims = [state_dim, *hidden_sizes, 1]
    keys = jax.random.split(key, 2 * (len(dims) - 1))
    for li in range(len(dims) - 1):
        fan_in, fan_out = dims[li], dims[li + 1]
        bound = 1.0 / float(np.sqrt(fan_in))
        wk, bk = keys[2 * li], keys[2 * li + 1]
        params[f"w{li + 1}"] = jax.random.uniform(
            wk, (fan_in, fan_out), jnp.float32, -bound, bound)
        params[f"b{li + 1}"] = jax.random.uniform(
            bk, (1, fan_out), jnp.float32, -bound, bound)
    return params


def reference_forward_np(state, params):
    """float64 host reference mirroring the PyTorch module's forward."""
    s = np.asarray(state, np.float64)
    h = np.tanh(s @ np.asarray(params["w1"], np.float64) + np.asarray(params["b1"], np.float64))
    h = np.tanh(h @ np.asarray(params["w2"], np.float64) + np.asarray(params["b2"], np.float64))
    return h @ np.asarray(params["w3"], np.float64) + np.asarray(params["b3"], np.float64)


if __name__ == "__main__":
    key = jax.random.PRNGKey(0)
    k_params, k_state = jax.random.split(key)

    B, STATE_DIM = 8, 32
    params = init_params(k_params, STATE_DIM, HIDDEN_SIZES)
    state = jax.random.normal(k_state, (B, STATE_DIM), jnp.float32)

    ref = reference_forward_np(state, params)

    # Exact path: f32 streaming + f32 activations (PyTorch-faithful semantics).
    out_f32 = jax.block_until_ready(
        critic_net_forward(state, params,
                           compute_dtype=jnp.float32, input_dtype=jnp.float32))
    assert out_f32.shape == (B, 1), out_f32.shape
    assert np.allclose(np.asarray(out_f32, np.float64), ref, atol=1e-2, rtol=1e-2), \
        "f32 kernel mismatch vs reference"

    # Default fast path: bf16 input streaming; bf16 tanh on v6e/v7x, f32 on v5e.
    out_fast = jax.block_until_ready(critic_net_forward(state, params))
    assert out_fast.shape == (B, 1), out_fast.shape
    assert np.allclose(np.asarray(out_fast, np.float64), ref, atol=6e-2, rtol=6e-2), \
        "fast-path kernel mismatch vs reference"

    print("KERNEL_OK")
</pallas_src>

<mosaic_0001>
module attributes {stable_mosaic.version = 11 : i64} {
  func.func @_critic_kernel(%arg0: i32, %arg1: memref<8x32xf32, #tpu.memory_space<vmem>>, %arg2: memref<64x32xf32, #tpu.memory_space<vmem>>, %arg3: memref<64x1xf32, #tpu.memory_space<vmem>>, %arg4: memref<64x64xf32, #tpu.memory_space<vmem>>, %arg5: memref<64x1xf32, #tpu.memory_space<vmem>>, %arg6: memref<1x64xf32, #tpu.memory_space<vmem>>, %arg7: memref<1x1xf32, #tpu.memory_space<vmem>>, %arg8: memref<1x1x8xf32, #tpu.memory_space<vmem>>) attributes {dimension_semantics = [#tpu.dimension_semantics<parallel>], iteration_bounds = array<i64: 1>, scalar_prefetch = 0 : i64, scratch_operands = 0 : i64, tpu.core_type = #tpu.core_type<tc>, window_params = [{transform_indices = @transform_0, window_bounds = array<i64: 8, 32>}, {pipeline_mode = #tpu.pipeline_mode<synchronous>, transform_indices = @transform_1, window_bounds = array<i64: 64, 32>}, {pipeline_mode = #tpu.pipeline_mode<synchronous>, transform_indices = @transform_2, window_bounds = array<i64: 64, 1>}, {pipeline_mode = #tpu.pipeline_mode<synchronous>, transform_indices = @transform_3, window_bounds = array<i64: 64, 64>}, {pipeline_mode = #tpu.pipeline_mode<synchronous>, transform_indices = @transform_4, window_bounds = array<i64: 64, 1>}, {pipeline_mode = #tpu.pipeline_mode<synchronous>, transform_indices = @transform_5, window_bounds = array<i64: 1, 64>}, {pipeline_mode = #tpu.pipeline_mode<synchronous>, transform_indices = @transform_6, window_bounds = array<i64: 1, 1>}, {transform_indices = @transform_7, window_bounds = array<i64: 1, 1, 8>}]} {
    %c0 = arith.constant 0 : index
    %c0_0 = arith.constant 0 : index
    %0 = vector.load %arg1[%c0, %c0_0] : memref<8x32xf32, #tpu.memory_space<vmem>>, vector<8x32xf32>
    %c0_1 = arith.constant 0 : index
    %c0_2 = arith.constant 0 : index
    %1 = vector.load %arg2[%c0_1, %c0_2] : memref<64x32xf32, #tpu.memory_space<vmem>>, vector<64x32xf32>
    %cst = arith.constant dense<0.000000e+00> : vector<64x8xf32>
    %2 = tpu.matmul %1, %0, %cst {dimension_numbers = #tpu.dot_dimension_numbers<[1], [1], [0], [0], [0, 0, 1, 0], [], []>} : vector<64x32xf32>, vector<8x32xf32>, vector<64x8xf32> -> vector<64x8xf32>
    %c0_3 = arith.constant 0 : index
    %c0_4 = arith.constant 0 : index
    %3 = vector.load %arg3[%c0_3, %c0_4] : memref<64x1xf32, #tpu.memory_space<vmem>>, vector<64x1xf32>
    %4 = vector.broadcast %3 : vector<64x1xf32> to vector<64x8xf32>
    %5 = arith.addf %2, %4 : vector<64x8xf32>
    %6 = math.tanh %5 : vector<64x8xf32>
    %c0_5 = arith.constant 0 : index
    %c0_6 = arith.constant 0 : index
    %7 = vector.load %arg4[%c0_5, %c0_6] : memref<64x64xf32, #tpu.memory_space<vmem>>, vector<64x64xf32>
    %cst_7 = arith.constant dense<0.000000e+00> : vector<64x8xf32>
    %8 = tpu.matmul %7, %6, %cst_7 {dimension_numbers = #tpu.dot_dimension_numbers<[1], [0], [0], [1], [0, 0, 1, 1], [], []>} : vector<64x64xf32>, vector<64x8xf32>, vector<64x8xf32> -> vector<64x8xf32>
    %c0_8 = arith.constant 0 : index
    %c0_9 = arith.constant 0 : index
    %9 = vector.load %arg5[%c0_8, %c0_9] : memref<64x1xf32, #tpu.memory_space<vmem>>, vector<64x1xf32>
    %10 = vector.broadcast %9 : vector<64x1xf32> to vector<64x8xf32>
    %11 = arith.addf %8, %10 : vector<64x8xf32>
    %12 = math.tanh %11 : vector<64x8xf32>
    %c0_10 = arith.constant 0 : index
    %c0_11 = arith.constant 0 : index
    %13 = vector.load %arg6[%c0_10, %c0_11] : memref<1x64xf32, #tpu.memory_space<vmem>>, vector<1x64xf32>
    %cst_12 = arith.constant dense<0.000000e+00> : vector<1x8xf32>
    %14 = tpu.matmul %13, %12, %cst_12 {dimension_numbers = #tpu.dot_dimension_numbers<[1], [0], [0], [1], [0, 0, 1, 1], [], []>} : vector<1x64xf32>, vector<64x8xf32>, vector<1x8xf32> -> vector<1x8xf32>
    %c0_13 = arith.constant 0 : index
    %c0_14 = arith.constant 0 : index
    %15 = vector.load %arg7[%c0_13, %c0_14] : memref<1x1xf32, #tpu.memory_space<vmem>>, vector<1x1xf32>
    %16 = vector.broadcast %15 : vector<1x1xf32> to vector<1x8xf32>
    %17 = arith.addf %14, %16 : vector<1x8xf32>
    %c0_15 = arith.constant 0 : index
    %c0_16 = arith.constant 0 : index
    %c0_17 = arith.constant 0 : index
    %18 = vector.load %arg8[%c0_15, %c0_16, %c0_17] : memref<1x1x8xf32, #tpu.memory_space<vmem>>, vector<1x1x8xf32>
    %19 = vector.shape_cast %18 : vector<1x1x8xf32> to vector<1x8xf32>
    %20 = vector.shape_cast %17 : vector<1x8xf32> to vector<1x1x8xf32>
    tpu.vector_store %arg8[%c0_15, %c0_16, %c0_17], %20 {strides = array<i32>} : memref<1x1x8xf32, #tpu.memory_space<vmem>>, vector<1x1x8xf32>,
    return
  }
  func.func @transform_0(%arg0: i32) -> (i32, i32) {
    %c0_i32 = arith.constant 0 : i32
    %c0_i32_0 = arith.constant 0 : i32
    return %arg0, %c0_i32 : i32, i32
  }
  func.func @transform_1(%arg0: i32) -> (i32, i32) {
    %c0_i32 = arith.constant 0 : i32
    %c0_i32_0 = arith.constant 0 : i32
    %c0_i32_1 = arith.constant 0 : i32
    return %c0_i32, %c0_i32_0 : i32, i32
  }
  func.func @transform_2(%arg0: i32) -> (i32, i32) {
    %c0_i32 = arith.constant 0 : i32
    %c0_i32_0 = arith.constant 0 : i32
    %c0_i32_1 = arith.constant 0 : i32
    return %c0_i32, %c0_i32_0 : i32, i32
  }
  func.func @transform_3(%arg0: i32) -> (i32, i32) {
    %c0_i32 = arith.constant 0 : i32
    %c0_i32_0 = arith.constant 0 : i32
    %c0_i32_1 = arith.constant 0 : i32
    return %c0_i32, %c0_i32_0 : i32, i32
  }
  func.func @transform_4(%arg0: i32) -> (i32, i32) {
    %c0_i32 = arith.constant 0 : i32
    %c0_i32_0 = arith.constant 0 : i32
    %c0_i32_1 = arith.constant 0 : i32
    return %c0_i32, %c0_i32_0 : i32, i32
  }
  func.func @transform_5(%arg0: i32) -> (i32, i32) {
    %c0_i32 = arith.constant 0 : i32
    %c0_i32_0 = arith.constant 0 : i32
    %c0_i32_1 = arith.constant 0 : i32
    return %c0_i32, %c0_i32_0 : i32, i32
  }
  func.func @transform_6(%arg0: i32) -> (i32, i32) {
    %c0_i32 = arith.constant 0 : i32
    %c0_i32_0 = arith.constant 0 : i32
    %c0_i32_1 = arith.constant 0 : i32
    return %c0_i32, %c0_i32_0 : i32, i32
  }
  func.func @transform_7(%arg0: i32) -> (i32, i32, i32) {
    %c0_i32 = arith.constant 0 : i32
    %c0_i32_0 = arith.constant 0 : i32
    %c0_i32_1 = arith.constant 0 : i32
    return %arg0, %c0_i32, %c0_i32_0 : i32, i32, i32
  }
}

</mosaic_0001>

<llo_original>
// kernel: tpu_custom_call.1
$region0: #{tpu_custom_call.1}
  #allocation0 [shape = 'u32[]', space=smem, size = 0x4, offset = 0x4, fixed_abs, tag = 'smem constant byte address 0x4 - core index']
  #allocation1 [shape = 'u32[144,128]{1,0:T(1,128)}', space=vmem, size = 0x12000, scoped, tag = 'internal scratch']
  #allocation2 [shape = 'f32[1,1]{1,0:T(1,128)S(1)}', space=vmem, size = 0x200, scoped, tag = 'scoped memory for tpu_custom_call.1']
  %s0 = inlined_call_operand.vmem [shape: f32[8,32], index: 0, kind: input, shape index: {}]
  %s1 = inlined_call_operand.vmem [shape: f32[64,32], index: 1, kind: input, shape index: {}]
  %s2 = inlined_call_operand.vmem [shape: f32[64,1], index: 2, kind: input, shape index: {}]
  %s3 = inlined_call_operand.vmem [shape: f32[64,64], index: 3, kind: input, shape index: {}]
  %s4 = inlined_call_operand.vmem [shape: f32[64,1], index: 4, kind: input, shape index: {}]
  %s5 = inlined_call_operand.vmem [shape: f32[1,64], index: 5, kind: input, shape index: {}]
  %s6 = inlined_call_operand.<no memory space> [shape: f32[1,1], index: 6, kind: input, shape index: {}]
  %s7 = inlined_call_operand.hbm [shape: f32[1,1,8], index: 7, kind: output, shape index: {}]
  %s8 = sld [smem:[#allocation0]]
  $region38: #{tpu_custom_call.1} parent=0
    _
  %s10 = ssub.s32 1, %s8
  %s11 = scalar_select 0, %s10, %s8
  %v12 = vstv %s6
  %13 = vst [vmem:[#allocation2] sm:$0x1] %v12
  $region1: #{tpu_custom_call.1} parent=0
    #allocation3 [shape = 'u8[512]{0}', space=vmem, size = 0x400, scoped, tag = 'output window, operand 0, single buffered']
    #allocation4 [shape = 's32[1]{0}', space=sflag, size = 0x4, scoped, tag = 'scoped memory for tpu_custom_call.1']
    %14 = vsyncpa [#allocation4], 0
    // Predicated region
    $region2: #{tpu_custom_call.1} parent=1 // pred_check
      _
    $region3: #{tpu_custom_call.1} parent=1 // pred_check_branch
      %16 = sbr.rel (0) target = $region5
    $region4: #{tpu_custom_call.1} parent=1 // pred_region
      _
    $region5: #{tpu_custom_call.1} parent=1 // pred_fallthru
      _
    // Predicated region
    $region6: #{tpu_custom_call.1} parent=1 // pred_check
      _
    $region7: #{tpu_custom_call.1} parent=1 // pred_check_branch
      %18 = sbr.rel (0) target = $region9
    $region8: #{tpu_custom_call.1} parent=1 // pred_region
      _
    $region9: #{tpu_custom_call.1} parent=1 // pred_fallthru
      _
    // Predicated region
    $region10: #{tpu_custom_call.1} parent=1 // pred_check
      _
    $region11: #{tpu_custom_call.1} parent=1 // pred_check_branch
      %20 = sbr.rel (0) target = $region13
    $region12: #{tpu_custom_call.1} parent=1 // pred_region
      _
    $region13: #{tpu_custom_call.1} parent=1 // pred_fallthru
      _
    // Predicated region
    $region14: #{tpu_custom_call.1} parent=1 // pred_check
      _
    $region15: #{tpu_custom_call.1} parent=1 // pred_check_branch
      %22 = sbr.rel (0) target = $region17
    $region16: #{tpu_custom_call.1} parent=1 // pred_region
      _
    $region17: #{tpu_custom_call.1} parent=1 // pred_fallthru
      _
    // Predicated region
    $region18: #{tpu_custom_call.1} parent=1 // pred_check
      _
    $region19: #{tpu_custom_call.1} parent=1 // pred_check_branch
      %24 = sbr.rel (0) target = $region21
    $region20: #{tpu_custom_call.1} parent=1 // pred_region
      _
    $region21: #{tpu_custom_call.1} parent=1 // pred_fallthru
      _
    // Predicated region
    $region22: #{tpu_custom_call.1} parent=1 // pred_check
      _
    $region23: #{tpu_custom_call.1} parent=1 // pred_check_branch
      %26 = sbr.rel (0) target = $region25
    $region24: #{tpu_custom_call.1} parent=1 // pred_region
      _
    $region25: #{tpu_custom_call.1} parent=1 // pred_fallthru
      _
    // Predicated region
    $region26: #{tpu_custom_call.1} parent=1 // pred_check
      _
    $region27: #{tpu_custom_call.1} parent=1 // pred_check_branch
      %28 = sbr.rel (0) target = $region29
    $region28: #{tpu_custom_call.1} parent=1 // pred_region
      _
    $region29: #{tpu_custom_call.1} parent=1 // pred_fallthru
      _
    %v29 = vld [vmem:[%s0] sm:$0xff]
    %v30 = vld [vmem:[%s1] sm:$0xff]
    %v31 = vld [vmem:[%s1 + $0x8] sm:$0xff]
    %v32 = vld [vmem:[%s1 + $0x10] sm:$0xff]
    %v33 = vld [vmem:[%s1 + $0x18] sm:$0xff]
    %v34 = vld [vmem:[%s1 + $0x20] sm:$0xff]
    %v35 = vld [vmem:[%s1 + $0x28] sm:$0xff]
    %v36 = vld [vmem:[%s1 + $0x30] sm:$0xff]
    %v37 = vld [vmem:[%s1 + $0x38] sm:$0xff]
    %v38 = vld [vmem:[%s2] sm:$0xff]
    %v39 = vld [vmem:[%s2 + $0x8] sm:$0xff]
    %v40 = vld [vmem:[%s2 + $0x10] sm:$0xff]
    %v41 = vld [vmem:[%s2 + $0x18] sm:$0xff]
    %v42 = vld [vmem:[%s2 + $0x20] sm:$0xff]
    %v43 = vld [vmem:[%s2 + $0x28] sm:$0xff]
    %v44 = vld [vmem:[%s2 + $0x30] sm:$0xff]
    %v45 = vld [vmem:[%s2 + $0x38] sm:$0xff]
    %47 = vset.pattern.permute.xlu0 0
    %48 = vperm.xlu0 %47, %v38
    %v49 = vpop.permute.xlu0 %48
    %52 = vset.pattern.permute.xlu0 0
    %53 = vperm.xlu0 %52, %v39
    %v54 = vpop.permute.xlu0 %53
    %57 = vset.pattern.permute.xlu0 0
    %58 = vperm.xlu0 %57, %v40
    %v59 = vpop.permute.xlu0 %58
    %62 = vset.pattern.permute.xlu0 0
    %63 = vperm.xlu0 %62, %v41
    %v64 = vpop.permute.xlu0 %63
    %67 = vset.pattern.permute.xlu0 0
    %68 = vperm.xlu0 %67, %v42
    %v69 = vpop.permute.xlu0 %68
    %72 = vset.pattern.permute.xlu0 0
    %73 = vperm.xlu0 %72, %v43
    %v74 = vpop.permute.xlu0 %73
    %77 = vset.pattern.permute.xlu0 0
    %78 = vperm.xlu0 %77, %v44
    %v79 = vpop.permute.xlu0 %78
    %82 = vset.pattern.permute.xlu0 0
    %83 = vperm.xlu0 %82, %v45
    %v84 = vpop.permute.xlu0 %83
    %vm86 = vcmask 261120
    %v88 = vsel %vm86, %v30, 0
    %v91 = vsel %vm86, %v31, 0
    %v94 = vsel %vm86, %v32, 0
    %v97 = vsel %vm86, %v33, 0
    %v100 = vsel %vm86, %v34, 0
    %v103 = vsel %vm86, %v35, 0
    %v106 = vsel %vm86, %v36, 0
    %v109 = vsel %vm86, %v37, 0
    %v112 = vsel %vm86, %v29, 0
    %114 = vmatprep.subr.mxu0 0.0
    %115 = vmatpush1.xpose.msra.mxu0 0.0
    %116 = vmatprep.subr.mxu0 0.0
    %117 = vmatpush1.xpose.msra.mxu0 0.0
    %118 = vmatprep.subr.mxu0 0.0
    %119 = vmatpush1.xpose.msra.mxu0 0.0
    %120 = vmatprep.subr.mxu0 0.0
    %121 = vmatpush1.xpose.msra.mxu0 0.0
    %122 = vmatprep.subr.mxu0 0.0
    %123 = vmatpush1.xpose.msra.mxu0 0.0
    %124 = vmatprep.subr.mxu0 0.0
    %125 = vmatpush1.xpose.msra.mxu0 0.0
    %126 = vmatprep.subr.mxu0 0.0
    %127 = vmatpush1.xpose.msra.mxu0 0.0
    %128 = vmatprep.subr.mxu0 0.0
    %129 = vmatpush1.xpose.msra.mxu0 0.0
    %130 = vmatprep.subr.mxu0 0.0
    %131 = vmatpush1.xpose.msra.mxu0 0.0
    %132 = vmatprep.subr.mxu0 0.0
    %133 = vmatpush1.xpose.msra.mxu0 0.0
    %134 = vmatprep.subr.mxu0 0.0
    %135 = vmatpush1.xpose.msra.mxu0 0.0
    %136 = vmatprep.subr.mxu0 0.0
    %137 = vmatpush1.xpose.msra.mxu0 0.0
    %138 = vmatprep.subr.mxu0 0.0
    %139 = vmatpush1.xpose.msra.mxu0 0.0
    %140 = vmatprep.subr.mxu0 0.0
    %141 = vmatpush1.xpose.msra.mxu0 0.0
    %142 = vmatprep.subr.mxu0 0.0
    %143 = vmatpush1.xpose.msra.mxu0 0.0
    %144 = vmatprep.subr.mxu0 0.0
    %145 = vmatpush1.xpose.msra.mxu0 %v112
    %146 = vmatprep.subr.mxu0 0.0
    %147 = vmatpush2.xpose.msra.mxu0 0.0
    %148 = vmatprep.subr.mxu0 0.0
    %149 = vmatpush2.xpose.msra.mxu0 0.0
    %150 = vmatprep.subr.mxu0 0.0
    %151 = vmatpush2.xpose.msra.mxu0 0.0
    %152 = vmatprep.subr.mxu0 0.0
    %153 = vmatpush2.xpose.msra.mxu0 0.0
    %154 = vmatprep.subr.mxu0 0.0
    %155 = vmatpush2.xpose.msra.mxu0 0.0
    %156 = vmatprep.subr.mxu0 0.0
    %157 = vmatpush2.xpose.msra.mxu0 0.0
    %158 = vmatprep.subr.mxu0 0.0
    %159 = vmatpush2.xpose.msra.mxu0 0.0
    %160 = vmatprep.subr.mxu0 0.0
    %161 = vmatpush2.xpose.msra.mxu0 0.0
    %162 = vmatprep.subr.mxu0 0.0
    %163 = vmatpush2.xpose.msra.mxu0 0.0
    %164 = vmatprep.subr.mxu0 0.0
    %165 = vmatpush2.xpose.msra.mxu0 0.0
    %166 = vmatprep.subr.mxu0 0.0
    %167 = vmatpush2.xpose.msra.mxu0 0.0
    %168 = vmatprep.subr.mxu0 0.0
    %169 = vmatpush2.xpose.msra.mxu0 0.0
    %170 = vmatprep.subr.mxu0 0.0
    %171 = vmatpush2.xpose.msra.mxu0 0.0
    %172 = vmatprep.subr.mxu0 0.0
    %173 = vmatpush2.xpose.msra.mxu0 0.0
    %174 = vmatprep.subr.mxu0 0.0
    %175 = vmatpush2.xpose.msra.mxu0 0.0
    %176 = vmatprep.subr.mxu0 0.0
    %177 = vmatpush2.xpose.msra.mxu0 0.0
    %178 = vmatprep.mubr.f32.mxu0 0.0
    %179 = vmatmul.mubr.f32.gmra.mxu0 %v88
    %v180 = vpop.f32.mrf.mxu0
    %v181 = vadd.f32 %v49, %v180
    %v182 = vpop.f32.mrf.mxu0
    %183 = vmatprep.mubr.f32.mxu0 0.0
    %184 = vmatmul.mubr.f32.gmra.mxu0 %v91
    %v185 = vpop.f32.mrf.mxu0
    %v186 = vadd.f32 %v54, %v185
    %v187 = vpop.f32.mrf.mxu0
    %188 = vmatprep.mubr.f32.mxu0 0.0
    %189 = vmatmul.mubr.f32.gmra.mxu0 %v94
    %v190 = vpop.f32.mrf.mxu0
    %v191 = vadd.f32 %v59, %v190
    %v192 = vpop.f32.mrf.mxu0
    %193 = vmatprep.mubr.f32.mxu0 0.0
    %194 = vmatmul.mubr.f32.gmra.mxu0 %v97
    %v195 = vpop.f32.mrf.mxu0
    %v196 = vadd.f32 %v64, %v195
    %v197 = vpop.f32.mrf.mxu0
    %198 = vmatprep.mubr.f32.mxu0 0.0
    %199 = vmatmul.mubr.f32.gmra.mxu0 %v100
    %v200 = vpop.f32.mrf.mxu0
    %v201 = vadd.f32 %v69, %v200
    %v202 = vpop.f32.mrf.mxu0
    %203 = vmatprep.mubr.f32.mxu0 0.0
    %204 = vmatmul.mubr.f32.gmra.mxu0 %v103
    %v205 = vpop.f32.mrf.mxu0
    %v206 = vadd.f32 %v74, %v205
    %v207 = vpop.f32.mrf.mxu0
    %208 = vmatprep.mubr.f32.mxu0 0.0
    %209 = vmatmul.mubr.f32.gmra.mxu0 %v106
    %v210 = vpop.f32.mrf.mxu0
    %v211 = vadd.f32 %v79, %v210
    %v212 = vpop.f32.mrf.mxu0
    %213 = vmatprep.mubr.f32.mxu0 0.0
    %214 = vmatmul.mubr.f32.gmra.mxu0 %v109
    %v215 = vpop.f32.mrf.mxu0
    %v216 = vadd.f32 %v84, %v215
    %v217 = vpop.f32.mrf.mxu0
    %218 = vdwg.mxu0
    %v219 = vtanh.pop %v181
    %v220 = vtanh.pop %v186
    %v221 = vtanh.pop %v191
    %v222 = vtanh.pop %v196
    %v223 = vtanh.pop %v201
    %v224 = vtanh.pop %v206
    %v225 = vtanh.pop %v211
    %v226 = vtanh.pop %v216
    %v227 = vld [vmem:[%s3] sm:$0xff]
    %v228 = vld [vmem:[%s3 + $0x8] sm:$0xff]
    %v229 = vld [vmem:[%s3 + $0x10] sm:$0xff]
    %v230 = vld [vmem:[%s3 + $0x18] sm:$0xff]
    %v231 = vld [vmem:[%s3 + $0x20] sm:$0xff]
    %v232 = vld [vmem:[%s3 + $0x28] sm:$0xff]
    %v233 = vld [vmem:[%s3 + $0x30] sm:$0xff]
    %v234 = vld [vmem:[%s3 + $0x38] sm:$0xff]
    %v235 = vld [vmem:[%s4] sm:$0xff]
    %v236 = vld [vmem:[%s4 + $0x8] sm:$0xff]
    %v237 = vld [vmem:[%s4 + $0x10] sm:$0xff]
    %v238 = vld [vmem:[%s4 + $0x18] sm:$0xff]
    %v239 = vld [vmem:[%s4 + $0x20] sm:$0xff]
    %v240 = vld [vmem:[%s4 + $0x28] sm:$0xff]
    %v241 = vld [vmem:[%s4 + $0x30] sm:$0xff]
    %v242 = vld [vmem:[%s4 + $0x38] sm:$0xff]
    %244 = vset.pattern.permute.xlu0 0
    %245 = vperm.xlu0 %244, %v235
    %v246 = vpop.permute.xlu0 %245
    %249 = vset.pattern.permute.xlu0 0
    %250 = vperm.xlu0 %249, %v236
    %v251 = vpop.permute.xlu0 %250
    %254 = vset.pattern.permute.xlu0 0
    %255 = vperm.xlu0 %254, %v237
    %v256 = vpop.permute.xlu0 %255
    %259 = vset.pattern.permute.xlu0 0
    %260 = vperm.xlu0 %259, %v238
    %v261 = vpop.permute.xlu0 %260
    %264 = vset.pattern.permute.xlu0 0
    %265 = vperm.xlu0 %264, %v239
    %v266 = vpop.permute.xlu0 %265
    %269 = vset.pattern.permute.xlu0 0
    %270 = vperm.xlu0 %269, %v240
    %v271 = vpop.permute.xlu0 %270
    %274 = vset.pattern.permute.xlu0 0
    %275 = vperm.xlu0 %274, %v241
    %v276 = vpop.permute.xlu0 %275
    %279 = vset.pattern.permute.xlu0 0
    %280 = vperm.xlu0 %279, %v242
    %v281 = vpop.permute.xlu0 %280
    %vm283 = vcmask 523264
    %v285 = vsel %vm283, %v227, 0
    %v288 = vsel %vm283, %v228, 0
    %v291 = vsel %vm283, %v229, 0
    %v294 = vsel %vm283, %v230, 0
    %v297 = vsel %vm283, %v231, 0
    %v300 = vsel %vm283, %v232, 0
    %v303 = vsel %vm283, %v233, 0
    %v306 = vsel %vm283, %v234, 0
    %308 = vmatprep.subr.mxu0 0.0
    %309 = vmatpush1.msra.mxu0 0.0
    %310 = vmatprep.subr.mxu0 0.0
    %311 = vmatpush1.msra.mxu0 0.0
    %312 = vmatprep.subr.mxu0 0.0
    %313 = vmatpush1.msra.mxu0 0.0
    %314 = vmatprep.subr.mxu0 0.0
    %315 = vmatpush1.msra.mxu0 0.0
    %316 = vmatprep.subr.mxu0 0.0
    %317 = vmatpush1.msra.mxu0 0.0
    %318 = vmatprep.subr.mxu0 0.0
    %319 = vmatpush1.msra.mxu0 0.0
    %320 = vmatprep.subr.mxu0 0.0
    %321 = vmatpush1.msra.mxu0 0.0
    %322 = vmatprep.subr.mxu0 0.0
    %323 = vmatpush1.msra.mxu0 0.0
    %324 = vmatprep.subr.mxu0 0.0
    %325 = vmatpush1.msra.mxu0 %v226
    %326 = vmatprep.subr.mxu0 0.0
    %327 = vmatpush1.msra.mxu0 %v225
    %328 = vmatprep.subr.mxu0 0.0
    %329 = vmatpush1.msra.mxu0 %v224
    %330 = vmatprep.subr.mxu0 0.0
    %331 = vmatpush1.msra.mxu0 %v223
    %332 = vmatprep.subr.mxu0 0.0
    %333 = vmatpush1.msra.mxu0 %v222
    %334 = vmatprep.subr.mxu0 0.0
    %335 = vmatpush1.msra.mxu0 %v221
    %336 = vmatprep.subr.mxu0 0.0
    %337 = vmatpush1.msra.mxu0 %v220
    %338 = vmatprep.subr.mxu0 0.0
    %339 = vmatpush1.msra.mxu0 %v219
    %340 = vmatprep.subr.mxu0 0.0
    %341 = vmatpush2.msra.mxu0 0.0
    %342 = vmatprep.subr.mxu0 0.0
    %343 = vmatpush2.msra.mxu0 0.0
    %344 = vmatprep.subr.mxu0 0.0
    %345 = vmatpush2.msra.mxu0 0.0
    %346 = vmatprep.subr.mxu0 0.0
    %347 = vmatpush2.msra.mxu0 0.0
    %348 = vmatprep.subr.mxu0 0.0
    %349 = vmatpush2.msra.mxu0 0.0
    %350 = vmatprep.subr.mxu0 0.0
    %351 = vmatpush2.msra.mxu0 0.0
    %352 = vmatprep.subr.mxu0 0.0
    %353 = vmatpush2.msra.mxu0 0.0
    %354 = vmatprep.subr.mxu0 0.0
    %355 = vmatpush2.msra.mxu0 0.0
    %356 = vmatprep.subr.mxu0 0.0
    %357 = vmatpush2.msra.mxu0 0.0
    %358 = vmatprep.subr.mxu0 0.0
    %359 = vmatpush2.msra.mxu0 0.0
    %360 = vmatprep.subr.mxu0 0.0
    %361 = vmatpush2.msra.mxu0 0.0
    %362 = vmatprep.subr.mxu0 0.0
    %363 = vmatpush2.msra.mxu0 0.0
    %364 = vmatprep.subr.mxu0 0.0
    %365 = vmatpush2.msra.mxu0 0.0
    %366 = vmatprep.subr.mxu0 0.0
    %367 = vmatpush2.msra.mxu0 0.0
    %368 = vmatprep.subr.mxu0 0.0
    %369 = vmatpush2.msra.mxu0 0.0
    %370 = vmatprep.subr.mxu0 0.0
    %371 = vmatpush2.msra.mxu0 0.0
    %372 = vmatprep.mubr.f32.mxu0 0.0
    %373 = vmatmul.mubr.f32.gmra.mxu0 %v285
    %v374 = vpop.f32.mrf.mxu0
    %v375 = vadd.f32 %v246, %v374
    %v376 = vpop.f32.mrf.mxu0
    %377 = vmatprep.mubr.f32.mxu0 0.0
    %378 = vmatmul.mubr.f32.gmra.mxu0 %v288
    %v379 = vpop.f32.mrf.mxu0
    %v380 = vadd.f32 %v251, %v379
    %v381 = vpop.f32.mrf.mxu0
    %382 = vmatprep.mubr.f32.mxu0 0.0
    %383 = vmatmul.mubr.f32.gmra.mxu0 %v291
    %v384 = vpop.f32.mrf.mxu0
    %v385 = vadd.f32 %v256, %v384
    %v386 = vpop.f32.mrf.mxu0
    %387 = vmatprep.mubr.f32.mxu0 0.0
    %388 = vmatmul.mubr.f32.gmra.mxu0 %v294
    %v389 = vpop.f32.mrf.mxu0
    %v390 = vadd.f32 %v261, %v389
    %v391 = vpop.f32.mrf.mxu0
    %392 = vmatprep.mubr.f32.mxu0 0.0
    %393 = vmatmul.mubr.f32.gmra.mxu0 %v297
    %v394 = vpop.f32.mrf.mxu0
    %v395 = vadd.f32 %v266, %v394
    %v396 = vpop.f32.mrf.mxu0
    %397 = vmatprep.mubr.f32.mxu0 0.0
    %398 = vmatmul.mubr.f32.gmra.mxu0 %v300
    %v399 = vpop.f32.mrf.mxu0
    %v400 = vadd.f32 %v271, %v399
    %v401 = vpop.f32.mrf.mxu0
    %402 = vmatprep.mubr.f32.mxu0 0.0
    %403 = vmatmul.mubr.f32.gmra.mxu0 %v303
    %v404 = vpop.f32.mrf.mxu0
    %v405 = vadd.f32 %v276, %v404
    %v406 = vpop.f32.mrf.mxu0
    %407 = vmatprep.mubr.f32.mxu0 0.0
    %408 = vmatmul.mubr.f32.gmra.mxu0 %v306
    %v409 = vpop.f32.mrf.mxu0
    %v410 = vadd.f32 %v281, %v409
    %v411 = vpop.f32.mrf.mxu0
    %412 = vdwg.mxu0
    %v413 = vtanh.pop %v375
    %v414 = vtanh.pop %v380
    %v415 = vtanh.pop %v385
    %v416 = vtanh.pop %v390
    %v417 = vtanh.pop %v395
    %v418 = vtanh.pop %v400
    %v419 = vtanh.pop %v405
    %v420 = vtanh.pop %v410
    %v421 = vld [vmem:[%s5] sm:$0x1]
    %v422 = vld [vmem:[#allocation2] sm:$0x1]
    %424 = vset.pattern.permute.xlu0 0
    %425 = vperm.xlu0 %424, %v422
    %v426 = vpop.permute.xlu0 %425
    %v428 = vlaneseq
    %v429 = vshrl.u32 %v428, 7
    %v430 = vsub.s32 0, %v429
    %v431 = vrot.slane %v426, %v430
    %v433 = vsel %vm283, %v421, 0
    %435 = vmatprep.subr.mxu0 0.0
    %436 = vmatpush1.msra.mxu0 0.0
    %437 = vmatprep.subr.mxu0 0.0
    %438 = vmatpush1.msra.mxu0 0.0
    %439 = vmatprep.subr.mxu0 0.0
    %440 = vmatpush1.msra.mxu0 0.0
    %441 = vmatprep.subr.mxu0 0.0
    %442 = vmatpush1.msra.mxu0 0.0
    %443 = vmatprep.subr.mxu0 0.0
    %444 = vmatpush1.msra.mxu0 0.0
    %445 = vmatprep.subr.mxu0 0.0
    %446 = vmatpush1.msra.mxu0 0.0
    %447 = vmatprep.subr.mxu0 0.0
    %448 = vmatpush1.msra.mxu0 0.0
    %449 = vmatprep.subr.mxu0 0.0
    %450 = vmatpush1.msra.mxu0 0.0
    %451 = vmatprep.subr.mxu0 0.0
    %452 = vmatpush1.msra.mxu0 %v420
    %453 = vmatprep.subr.mxu0 0.0
    %454 = vmatpush1.msra.mxu0 %v419
    %455 = vmatprep.subr.mxu0 0.0
    %456 = vmatpush1.msra.mxu0 %v418
    %457 = vmatprep.subr.mxu0 0.0
    %458 = vmatpush1.msra.mxu0 %v417
    %459 = vmatprep.subr.mxu0 0.0
    %460 = vmatpush1.msra.mxu0 %v416
    %461 = vmatprep.subr.mxu0 0.0
    %462 = vmatpush1.msra.mxu0 %v415
    %463 = vmatprep.subr.mxu0 0.0
    %464 = vmatpush1.msra.mxu0 %v414
    %465 = vmatprep.subr.mxu0 0.0
    %466 = vmatpush1.msra.mxu0 %v413
    %467 = vmatprep.subr.mxu0 0.0
    %468 = vmatpush2.msra.mxu0 0.0
    %469 = vmatprep.subr.mxu0 0.0
    %470 = vmatpush2.msra.mxu0 0.0
    %471 = vmatprep.subr.mxu0 0.0
    %472 = vmatpush2.msra.mxu0 0.0
    %473 = vmatprep.subr.mxu0 0.0
    %474 = vmatpush2.msra.mxu0 0.0
    %475 = vmatprep.subr.mxu0 0.0
    %476 = vmatpush2.msra.mxu0 0.0
    %477 = vmatprep.subr.mxu0 0.0
    %478 = vmatpush2.msra.mxu0 0.0
    %479 = vmatprep.subr.mxu0 0.0
    %480 = vmatpush2.msra.mxu0 0.0
    %481 = vmatprep.subr.mxu0 0.0
    %482 = vmatpush2.msra.mxu0 0.0
    %483 = vmatprep.subr.mxu0 0.0
    %484 = vmatpush2.msra.mxu0 0.0
    %485 = vmatprep.subr.mxu0 0.0
    %486 = vmatpush2.msra.mxu0 0.0
    %487 = vmatprep.subr.mxu0 0.0
    %488 = vmatpush2.msra.mxu0 0.0
    %489 = vmatprep.subr.mxu0 0.0
    %490 = vmatpush2.msra.mxu0 0.0
    %491 = vmatprep.subr.mxu0 0.0
    %492 = vmatpush2.msra.mxu0 0.0
    %493 = vmatprep.subr.mxu0 0.0
    %494 = vmatpush2.msra.mxu0 0.0
    %495 = vmatprep.subr.mxu0 0.0
    %496 = vmatpush2.msra.mxu0 0.0
    %497 = vmatprep.subr.mxu0 0.0
    %498 = vmatpush2.msra.mxu0 0.0
    %499 = vmatprep.mubr.f32.mxu0 0.0
    %500 = vmatmul.mubr.f32.gmra.mxu0 %v433
    %v501 = vpop.f32.mrf.mxu0
    %v502 = vadd.f32 %v431, %v501
    %v503 = vpop.f32.mrf.mxu0
    %504 = vdwg.mxu0
    %vm505 = vcmask 57344
    %506 = vst.msk [vmem:[#allocation3] sm:$0x1] %vm505, %v502
    // Predicated region
    $region30: #{tpu_custom_call.1} parent=1 // pred_check
      _
    $region31: #{tpu_custom_call.1} parent=1 // pred_check_branch
      %508 = sbr.rel (0) target = $region33
    $region32: #{tpu_custom_call.1} parent=1 // pred_region
      %s510 = ssub.s32 16, 16
      %511 = vsyncadd [#allocation4], %s510
      %s513 = sshll.u32 [#allocation3], 4
      %s514 = int_to_ptr.vmem [resolvable:$true] %s513
      %516 = dma.vmem_to_hbm [thread:$0]  %s514, 16, %s7, [#allocation4]
    $region33: #{tpu_custom_call.1} parent=1 // pred_fallthru
      _
    // Predicated region
    $region34: #{tpu_custom_call.1} parent=1 // pred_check
      _
    $region35: #{tpu_custom_call.1} parent=1 // pred_check_branch
      %518 = sbr.rel (0) target = $region37
    $region36: #{tpu_custom_call.1} parent=1 // pred_region
      %519 = dma.done [#allocation4], 16
    $region37: #{tpu_custom_call.1} parent=1 // pred_fallthru
      _
    %520 = vsyncpa [#allocation4], 1

</llo_original>
